<compile_context>
chip_gen: v6e
topology: v6e:2x2x1
jax: 0.10.0
libtpu: 0.0.40
codegen_flags: <defaults>
</compile_context>

<pallas_src>
import jax
import jax.numpy as jnp
from jax import lax
from jax.experimental import pallas as pl
from jax.experimental.pallas import tpu as pltpu


def _round_up(v, m):
    return (v + m - 1) // m * m


def fc_reg_kernel(x_ref, fil_ref, w_ref, b_ref, o_ref, acc_ref):
    # x_ref:   (tm, tk)       fil_ref: (1, tk)
    # w_ref:   (tn, tk)       b_ref:   (1, tn)
    # o_ref:   (tm, tn)       acc_ref: (tm, tn) f32 scratch (resident over K)
    k = pl.program_id(2)

    @pl.when(k == 0)
    def _():
        acc_ref[...] = jnp.zeros_like(acc_ref)

    # Filter scale in f32 on the VPU; cast only the MXU operand (no-op if the
    # cached weight is already f32).
    x_fil = (x_ref[...] * fil_ref[...]).astype(w_ref.dtype)
    # Weight is in PyTorch (o_dim, i_dim) layout -> contract last dim of both
    # operands; no wrapper-side transpose needed.
    acc_ref[...] += lax.dot_general(
        x_fil, w_ref[...],
        dimension_numbers=(((1,), (1,)), ((), ())),
        preferred_element_type=jnp.float32)

    @pl.when(k == pl.num_programs(2) - 1)
    def _():
        o_ref[...] = (acc_ref[...] + b_ref[...]).astype(o_ref.dtype)


def make_fc_reg(weight, bias, dim_list, *, tm=128, tn=256, tk=512,
                mxu_dtype=None):
    """Build an FC_reg forward callable.

    weight: (o_dim, i_dim) [PyTorch nn.Linear layout]; bias: (o_dim,).
    Parameter padding / dtype prep happens once here (cached across calls).
    """
    o_dim, i_dim = weight.shape
    assert sum(dim_list) == i_dim

    # Effective tile sizes (lane dims multiples of 128, clamped to padded dims).
    tn = min(tn, _round_up(o_dim, 128))
    tk = min(tk, _round_up(i_dim, 128))
    n_pad = _round_up(o_dim, tn)
    k_pad = _round_up(i_dim, tk)

    # --- one-time parameter prep (NOT on the per-call path) -----------------
    w_p = jnp.pad(weight, ((0, n_pad - o_dim), (0, k_pad - i_dim)))
    if mxu_dtype is not None:
        w_p = w_p.astype(mxu_dtype)          # halves weight HBM/VMEM traffic
    b_p = jnp.pad(bias.astype(jnp.float32), (0, n_pad - o_dim)).reshape(1, n_pad)
    dims = jnp.asarray(dim_list, dtype=jnp.int32)

    def forward(x, layer_weight):
        B, xi = x.shape
        assert xi == i_dim
        out_dtype = x.dtype

        tm_eff = min(tm, _round_up(B, 8))    # sublane-aligned batch tile (f32)
        m_pad = _round_up(B, tm_eff)

        # Cheap per-call glue: per-feature filter = |layer_weight| repeated.
        fil = jnp.repeat(jnp.abs(layer_weight).astype(jnp.float32), dims,
                         total_repeat_length=i_dim)
        fil = jnp.pad(fil, (0, k_pad - i_dim)).reshape(1, k_pad)

        x_p = x
        if (m_pad, k_pad) != (B, i_dim):
            x_p = jnp.pad(x, ((0, m_pad - B), (0, k_pad - i_dim)))

        grid = (m_pad // tm_eff, n_pad // tn, k_pad // tk)

        itemsize = lambda a: jnp.dtype(a.dtype).itemsize
        cost = pl.CostEstimate(
            flops=2 * m_pad * n_pad * k_pad,
            transcendentals=0,
            bytes_accessed=(x_p.size * itemsize(x_p)
                            + w_p.size * itemsize(w_p)
                            + fil.size * 4 + b_p.size * 4
                            + m_pad * n_pad * jnp.dtype(out_dtype).itemsize),
        )

        out_p = pl.pallas_call(
            fc_reg_kernel,
            out_shape=jax.ShapeDtypeStruct((m_pad, n_pad), out_dtype),
            grid_spec=pltpu.PrefetchScalarGridSpec(
                num_scalar_prefetch=0,
                grid=grid,
                in_specs=[
                    pl.BlockSpec((tm_eff, tk), lambda i, j, k: (i, k)),
                    pl.BlockSpec((1, tk), lambda i, j, k: (0, k)),
                    pl.BlockSpec((tn, tk), lambda i, j, k: (j, k)),
                    pl.BlockSpec((1, tn), lambda i, j, k: (0, j)),
                ],
                out_specs=pl.BlockSpec((tm_eff, tn), lambda i, j, k: (i, j)),
                scratch_shapes=[pltpu.VMEM((tm_eff, tn), jnp.float32)],
            ),
            compiler_params=pltpu.CompilerParams(
                # M/N parallel -> megacore sharding on v7x; K is the reduction.
                dimension_semantics=("parallel", "parallel", "arbitrary"),
                vmem_limit_bytes=32 * 1024 * 1024,
            ),
            cost_estimate=cost,
        )(x_p, fil, w_p, b_p)

        return out_p[:B, :o_dim]

    return forward


def fc_reg_reference(x, layer_weight, weight, bias, dim_list):
    fil = jnp.repeat(jnp.abs(layer_weight),
                     jnp.asarray(dim_list, dtype=jnp.int32),
                     total_repeat_length=x.shape[1]).reshape(1, -1)
    return (x * fil) @ weight.T + bias


if __name__ == "__main__":
    # Small shapes consistent with the module: dim_list gives per-layer feature
    # dims, i_dim = sum(dim_list), o_dim = number of "voxels".
    dim_list = [8, 16, 8]
    i_dim = sum(dim_list)          # 32
    o_dim = 16
    B = 8

    key = jax.random.PRNGKey(0)
    kx, kw, kb, klw = jax.random.split(key, 4)

    x = jax.random.normal(kx, (B, i_dim), dtype=jnp.float32)
    # nn.Linear(i_dim, o_dim): weight (o_dim, i_dim), bias (o_dim,)
    weight = jax.random.normal(kw, (o_dim, i_dim), dtype=jnp.float32) * 0.1
    bias = jax.random.normal(kb, (o_dim,), dtype=jnp.float32) * 0.1
    # __init__: layer_weight = ones(len(dim_list)) / len(dim_list)
    layer_weight = (jnp.ones((len(dim_list),), dtype=jnp.float32) / len(dim_list)
                    + 0.01 * jax.random.normal(klw, (len(dim_list),),
                                               dtype=jnp.float32))

    ref = fc_reg_reference(x, layer_weight, weight, bias, dim_list)

    # f32 MXU path: bit-for-bit semantics of the PyTorch module.
    fwd_f32 = make_fc_reg(weight, bias, dim_list)
    out = jax.block_until_ready(fwd_f32(x, layer_weight))
    assert out.shape == (B, o_dim)
    assert jnp.allclose(out, ref, atol=1e-5, rtol=1e-5), "f32 mismatch vs reference"

    # bf16 MXU operands + f32 accumulation (v6e/v7x fast path) — looser tol.
    fwd_bf16 = make_fc_reg(weight, bias, dim_list, mxu_dtype=jnp.bfloat16)
    out_bf16 = jax.block_until_ready(fwd_bf16(x, layer_weight))
    assert out_bf16.shape == (B, o_dim)
    assert jnp.allclose(out_bf16, ref, atol=2e-2, rtol=2e-2), "bf16 mismatch vs reference"

    print("KERNEL_OK")
</pallas_src>

<mosaic_0001>
module attributes {stable_mosaic.version = 11 : i64} {
  func.func @fc_reg_kernel(%arg0: i32, %arg1: i32, %arg2: i32, %arg3: memref<8x128xf32, #tpu.memory_space<vmem>>, %arg4: memref<1x128xf32, #tpu.memory_space<vmem>>, %arg5: memref<128x128xf32, #tpu.memory_space<vmem>>, %arg6: memref<1x128xf32, #tpu.memory_space<vmem>>, %arg7: memref<8x128xf32, #tpu.memory_space<vmem>>, %arg8: memref<8x128xf32, #tpu.memory_space<vmem>>) attributes {dimension_semantics = [#tpu.dimension_semantics<parallel>, #tpu.dimension_semantics<parallel>, #tpu.dimension_semantics<arbitrary>], iteration_bounds = array<i64: 1, 1, 1>, scalar_prefetch = 0 : i64, scratch_operands = 1 : i64, tpu.core_type = #tpu.core_type<tc>, window_params = [{transform_indices = @transform_0, window_bounds = array<i64: 8, 128>}, {transform_indices = @transform_1, window_bounds = array<i64: 1, 128>}, {transform_indices = @transform_2, window_bounds = array<i64: 128, 128>}, {transform_indices = @transform_3, window_bounds = array<i64: 1, 128>}, {transform_indices = @transform_4, window_bounds = array<i64: 8, 128>}]} {
    %c0_i32 = arith.constant 0 : i32
    %0 = arith.cmpi eq, %arg2, %c0_i32 : i32
    %1 = arith.extui %0 : i1 to i32
    %c0_i32_0 = arith.constant 0 : i32
    %2 = arith.cmpi ne, %1, %c0_i32_0 : i32
    scf.if %2 {
      %cst_12 = arith.constant 0.000000e+00 : f32
      %15 = vector.broadcast %cst_12 : f32 to vector<8x128xf32>
      %c0_13 = arith.constant 0 : index
      %c0_14 = arith.constant 0 : index
      %16 = vector.load %arg8[%c0_13, %c0_14] : memref<8x128xf32, #tpu.memory_space<vmem>>, vector<8x128xf32>
      tpu.vector_store %arg8[%c0_13, %c0_14], %15 {strides = array<i32>} : memref<8x128xf32, #tpu.memory_space<vmem>>, vector<8x128xf32>,
    } else {
    }
    %c0 = arith.constant 0 : index
    %c0_1 = arith.constant 0 : index
    %3 = vector.load %arg3[%c0, %c0_1] : memref<8x128xf32, #tpu.memory_space<vmem>>, vector<8x128xf32>
    %c0_2 = arith.constant 0 : index
    %c0_3 = arith.constant 0 : index
    %4 = vector.load %arg4[%c0_2, %c0_3] : memref<1x128xf32, #tpu.memory_space<vmem>>, vector<1x128xf32>
    %5 = vector.broadcast %4 : vector<1x128xf32> to vector<8x128xf32>
    %6 = arith.mulf %3, %5 : vector<8x128xf32>
    %c0_4 = arith.constant 0 : index
    %c0_5 = arith.constant 0 : index
    %7 = vector.load %arg8[%c0_4, %c0_5] : memref<8x128xf32, #tpu.memory_space<vmem>>, vector<8x128xf32>
    %c0_6 = arith.constant 0 : index
    %c0_7 = arith.constant 0 : index
    %8 = vector.load %arg5[%c0_6, %c0_7] : memref<128x128xf32, #tpu.memory_space<vmem>>, vector<128x128xf32>
    %cst = arith.constant dense<0.000000e+00> : vector<8x128xf32>
    %9 = tpu.matmul %6, %8, %cst {dimension_numbers = #tpu.dot_dimension_numbers<[1], [1], [0], [0], [0, 0, 1, 0], [], []>} : vector<8x128xf32>, vector<128x128xf32>, vector<8x128xf32> -> vector<8x128xf32>
    %10 = arith.addf %7, %9 : vector<8x128xf32>
    %c0_8 = arith.constant 0 : index
    %c0_9 = arith.constant 0 : index
    %11 = vector.load %arg8[%c0_8, %c0_9] : memref<8x128xf32, #tpu.memory_space<vmem>>, vector<8x128xf32>
    tpu.vector_store %arg8[%c0_8, %c0_9], %10 {strides = array<i32>} : memref<8x128xf32, #tpu.memory_space<vmem>>, vector<8x128xf32>,
    %c0_i32_10 = arith.constant 0 : i32
    %12 = arith.cmpi eq, %arg2, %c0_i32_10 : i32
    %13 = arith.extui %12 : i1 to i32
    %c0_i32_11 = arith.constant 0 : i32
    %14 = arith.cmpi ne, %13, %c0_i32_11 : i32
    scf.if %14 {
      %c0_12 = arith.constant 0 : index
      %c0_13 = arith.constant 0 : index
      %15 = vector.load %arg8[%c0_12, %c0_13] : memref<8x128xf32, #tpu.memory_space<vmem>>, vector<8x128xf32>
      %c0_14 = arith.constant 0 : index
      %c0_15 = arith.constant 0 : index
      %16 = vector.load %arg6[%c0_14, %c0_15] : memref<1x128xf32, #tpu.memory_space<vmem>>, vector<1x128xf32>
      %17 = vector.broadcast %16 : vector<1x128xf32> to vector<8x128xf32>
      %18 = arith.addf %15, %17 : vector<8x128xf32>
      %c0_16 = arith.constant 0 : index
      %c0_17 = arith.constant 0 : index
      %19 = vector.load %arg7[%c0_16, %c0_17] : memref<8x128xf32, #tpu.memory_space<vmem>>, vector<8x128xf32>
      tpu.vector_store %arg7[%c0_16, %c0_17], %18 {strides = array<i32>} : memref<8x128xf32, #tpu.memory_space<vmem>>, vector<8x128xf32>,
    } else {
    }
    return
  }
  func.func @transform_0(%arg0: i32, %arg1: i32, %arg2: i32) -> (i32, i32) {
    %c0_i32 = arith.constant 0 : i32
    return %arg0, %arg2 : i32, i32
  }
  func.func @transform_1(%arg0: i32, %arg1: i32, %arg2: i32) -> (i32, i32) {
    %c0_i32 = arith.constant 0 : i32
    %c0_i32_0 = arith.constant 0 : i32
    return %c0_i32, %arg2 : i32, i32
  }
  func.func @transform_2(%arg0: i32, %arg1: i32, %arg2: i32) -> (i32, i32) {
    %c0_i32 = arith.constant 0 : i32
    return %arg1, %arg2 : i32, i32
  }
  func.func @transform_3(%arg0: i32, %arg1: i32, %arg2: i32) -> (i32, i32) {
    %c0_i32 = arith.constant 0 : i32
    %c0_i32_0 = arith.constant 0 : i32
    return %c0_i32, %arg1 : i32, i32
  }
  func.func @transform_4(%arg0: i32, %arg1: i32, %arg2: i32) -> (i32, i32) {
    %c0_i32 = arith.constant 0 : i32
    return %arg0, %arg1 : i32, i32
  }
}

</mosaic_0001>

<llo_original>
// kernel: tpu_custom_call.1
$region0: #{tpu_custom_call.1}
  #allocation0 [shape = 'u32[]', space=smem, size = 0x4, offset = 0x4, fixed_abs, tag = 'smem constant byte address 0x4 - core index']
  #allocation1 [shape = 'u32[144,128]{1,0:T(1,128)}', space=vmem, size = 0x12000, scoped, tag = 'internal scratch']
  #allocation2 [shape = 'f32[8,128]{1,0:T(8,128)}', space=vmem, size = 0x1000, scoped, tag = 'scratch operand']
  %s0 = inlined_call_operand.hbm [shape: f32[8,128], index: 0, kind: input, shape index: {}]
  %s1 = inlined_call_operand.vmem [shape: f32[1,128], index: 1, kind: input, shape index: {}]
  %s2 = inlined_call_operand.hbm [shape: f32[128,128], index: 2, kind: input, shape index: {}]
  %s3 = inlined_call_operand.vmem [shape: f32[1,128], index: 3, kind: input, shape index: {}]
  %s4 = inlined_call_operand.hbm [shape: f32[8,128], index: 4, kind: output, shape index: {}]
  %s5 = sld [smem:[#allocation0]]
  $region42: #{tpu_custom_call.1} parent=0
    _
  %s7 = ssub.s32 1, %s5
  %s8 = scalar_select 0, %s7, %s5
  $region1: #{tpu_custom_call.1} parent=0
    #allocation3 [shape = 'u8[4096]{0}', space=vmem, size = 0x1000, scoped, tag = 'input window, operand 0, single buffered']
    #allocation4 [shape = 's32[1]{0}', space=sflag, size = 0x4, scoped, tag = 'scoped memory for tpu_custom_call.1']
    #allocation5 [shape = 's32[1]{0}', space=sflag, size = 0x4, scoped, tag = 'scoped memory for tpu_custom_call.1']
    #allocation6 [shape = 'u8[65536]{0}', space=vmem, size = 0x10000, scoped, tag = 'input window, operand 2, single buffered']
    #allocation7 [shape = 's32[1]{0}', space=sflag, size = 0x4, scoped, tag = 'scoped memory for tpu_custom_call.1']
    #allocation8 [shape = 'u8[4096]{0}', space=vmem, size = 0x1000, scoped, tag = 'output window, operand 0, single buffered']
    %9 = vsyncpa [#allocation4], 0
    %10 = vsyncpa [#allocation7], 0
    %11 = vsyncpa [#allocation5], 0
    // Predicated region
    $region2: #{tpu_custom_call.1} parent=1 // pred_check
      _
    $region3: #{tpu_custom_call.1} parent=1 // pred_check_branch
      %13 = sbr.rel (0) target = $region5
    $region4: #{tpu_custom_call.1} parent=1 // pred_region
      %s15 = ssub.s32 128, 128
      %16 = vsyncadd [#allocation4], %s15
      %s18 = sshll.u32 [#allocation3], 4
      %s19 = int_to_ptr.vmem [resolvable:$true] %s18
      %21 = dma.hbm_to_vmem [thread:$0]  %s0, 128, %s19, [#allocation4]
    $region5: #{tpu_custom_call.1} parent=1 // pred_fallthru
      _
    // Predicated region
    $region6: #{tpu_custom_call.1} parent=1 // pred_check
      _
    $region7: #{tpu_custom_call.1} parent=1 // pred_check_branch
      %23 = sbr.rel (0) target = $region9
    $region8: #{tpu_custom_call.1} parent=1 // pred_region
      _
    $region9: #{tpu_custom_call.1} parent=1 // pred_fallthru
      _
    // Predicated region
    $region10: #{tpu_custom_call.1} parent=1 // pred_check
      _
    $region11: #{tpu_custom_call.1} parent=1 // pred_check_branch
      %25 = sbr.rel (0) target = $region13
    $region12: #{tpu_custom_call.1} parent=1 // pred_region
      %s27 = ssub.s32 2048, 2048
      %28 = vsyncadd [#allocation7], %s27
      %s29 = sshll.u32 [#allocation6], 4
      %s30 = int_to_ptr.vmem [resolvable:$true] %s29
      %35 = dma.hbm_to_vmem [thread:$0]  %s2, 2048, %s30, [#allocation7], 128, 128, 8
    $region13: #{tpu_custom_call.1} parent=1 // pred_fallthru
      _
    // Predicated region
    $region14: #{tpu_custom_call.1} parent=1 // pred_check
      _
    $region15: #{tpu_custom_call.1} parent=1 // pred_check_branch
      %37 = sbr.rel (0) target = $region17
    $region16: #{tpu_custom_call.1} parent=1 // pred_region
      _
    $region17: #{tpu_custom_call.1} parent=1 // pred_fallthru
      _
    // Predicated region
    $region18: #{tpu_custom_call.1} parent=1 // pred_check
      _
    $region19: #{tpu_custom_call.1} parent=1 // pred_check_branch
      %39 = sbr.rel (0) target = $region21
    $region20: #{tpu_custom_call.1} parent=1 // pred_region
      %40 = dma.done [#allocation4], 128
    $region21: #{tpu_custom_call.1} parent=1 // pred_fallthru
      _
    // Predicated region
    $region22: #{tpu_custom_call.1} parent=1 // pred_check
      _
    $region23: #{tpu_custom_call.1} parent=1 // pred_check_branch
      %42 = sbr.rel (0) target = $region25
    $region24: #{tpu_custom_call.1} parent=1 // pred_region
      %43 = dma.done [#allocation7], 2048
    $region25: #{tpu_custom_call.1} parent=1 // pred_fallthru
      _
    %p44 = scmp.eq.s32.totalorder 0, 0
    // Predicated region
    $region26: #{tpu_custom_call.1} parent=1 // pred_check
      %p45 = pneg %p44
    $region27: #{tpu_custom_call.1} parent=1 // pred_check_branch
      %47 = sbr.rel (%p45) target = $region29
    $region28: #{tpu_custom_call.1} parent=1 // pred_region
      %48 = vst [vmem:[#allocation2] sm:$0xff] 0.0
    $region29: #{tpu_custom_call.1} parent=1 // pred_fallthru
      _
    %v49 = vld [vmem:[#allocation3] sm:$0xff]
    %v50 = vld [vmem:[%s1] sm:$0x1]
    %v52 = vlaneseq
    %v53 = vshrl.u32 %v52, 7
    %v54 = vsub.s32 0, %v53
    %v55 = vrot.slane %v50, %v54
    %v57 = vmul.f32 %v49, %v55
    %v58 = vld [vmem:[#allocation2] sm:$0xff]
    %v59 = vld [vmem:[#allocation6] sm:$0xff]
    %v60 = vld [vmem:[#allocation6 + $0x8] sm:$0xff]
    %v61 = vld [vmem:[#allocation6 + $0x10] sm:$0xff]
    %v62 = vld [vmem:[#allocation6 + $0x18] sm:$0xff]
    %v63 = vld [vmem:[#allocation6 + $0x20] sm:$0xff]
    %v64 = vld [vmem:[#allocation6 + $0x28] sm:$0xff]
    %v65 = vld [vmem:[#allocation6 + $0x30] sm:$0xff]
    %v66 = vld [vmem:[#allocation6 + $0x38] sm:$0xff]
    %v67 = vld [vmem:[#allocation6 + $0x40] sm:$0xff]
    %v68 = vld [vmem:[#allocation6 + $0x48] sm:$0xff]
    %v69 = vld [vmem:[#allocation6 + $0x50] sm:$0xff]
    %v70 = vld [vmem:[#allocation6 + $0x58] sm:$0xff]
    %v71 = vld [vmem:[#allocation6 + $0x60] sm:$0xff]
    %v72 = vld [vmem:[#allocation6 + $0x68] sm:$0xff]
    %v73 = vld [vmem:[#allocation6 + $0x70] sm:$0xff]
    %v74 = vld [vmem:[#allocation6 + $0x78] sm:$0xff]
    %75 = vmatprep.subr.mxu0 0.0
    %76 = vmatpush1.xpose.msra.mxu0 %v74
    %77 = vmatprep.subr.mxu0 0.0
    %78 = vmatpush1.xpose.msra.mxu0 %v73
    %79 = vmatprep.subr.mxu0 0.0
    %80 = vmatpush1.xpose.msra.mxu0 %v72
    %81 = vmatprep.subr.mxu0 0.0
    %82 = vmatpush1.xpose.msra.mxu0 %v71
    %83 = vmatprep.subr.mxu0 0.0
    %84 = vmatpush1.xpose.msra.mxu0 %v70
    %85 = vmatprep.subr.mxu0 0.0
    %86 = vmatpush1.xpose.msra.mxu0 %v69
    %87 = vmatprep.subr.mxu0 0.0
    %88 = vmatpush1.xpose.msra.mxu0 %v68
    %89 = vmatprep.subr.mxu0 0.0
    %90 = vmatpush1.xpose.msra.mxu0 %v67
    %91 = vmatprep.subr.mxu0 0.0
    %92 = vmatpush1.xpose.msra.mxu0 %v66
    %93 = vmatprep.subr.mxu0 0.0
    %94 = vmatpush1.xpose.msra.mxu0 %v65
    %95 = vmatprep.subr.mxu0 0.0
    %96 = vmatpush1.xpose.msra.mxu0 %v64
    %97 = vmatprep.subr.mxu0 0.0
    %98 = vmatpush1.xpose.msra.mxu0 %v63
    %99 = vmatprep.subr.mxu0 0.0
    %100 = vmatpush1.xpose.msra.mxu0 %v62
    %101 = vmatprep.subr.mxu0 0.0
    %102 = vmatpush1.xpose.msra.mxu0 %v61
    %103 = vmatprep.subr.mxu0 0.0
    %104 = vmatpush1.xpose.msra.mxu0 %v60
    %105 = vmatprep.subr.mxu0 0.0
    %106 = vmatpush1.xpose.msra.mxu0 %v59
    %107 = vmatprep.subr.mxu0 0.0
    %108 = vmatpush2.xpose.msra.mxu0 0.0
    %109 = vmatprep.subr.mxu0 0.0
    %110 = vmatpush2.xpose.msra.mxu0 0.0
    %111 = vmatprep.subr.mxu0 0.0
    %112 = vmatpush2.xpose.msra.mxu0 0.0
    %113 = vmatprep.subr.mxu0 0.0
    %114 = vmatpush2.xpose.msra.mxu0 0.0
    %115 = vmatprep.subr.mxu0 0.0
    %116 = vmatpush2.xpose.msra.mxu0 0.0
    %117 = vmatprep.subr.mxu0 0.0
    %118 = vmatpush2.xpose.msra.mxu0 0.0
    %119 = vmatprep.subr.mxu0 0.0
    %120 = vmatpush2.xpose.msra.mxu0 0.0
    %121 = vmatprep.subr.mxu0 0.0
    %122 = vmatpush2.xpose.msra.mxu0 0.0
    %123 = vmatprep.subr.mxu0 0.0
    %124 = vmatpush2.xpose.msra.mxu0 0.0
    %125 = vmatprep.subr.mxu0 0.0
    %126 = vmatpush2.xpose.msra.mxu0 0.0
    %127 = vmatprep.subr.mxu0 0.0
    %128 = vmatpush2.xpose.msra.mxu0 0.0
    %129 = vmatprep.subr.mxu0 0.0
    %130 = vmatpush2.xpose.msra.mxu0 0.0
    %131 = vmatprep.subr.mxu0 0.0
    %132 = vmatpush2.xpose.msra.mxu0 0.0
    %133 = vmatprep.subr.mxu0 0.0
    %134 = vmatpush2.xpose.msra.mxu0 0.0
    %135 = vmatprep.subr.mxu0 0.0
    %136 = vmatpush2.xpose.msra.mxu0 0.0
    %137 = vmatprep.subr.mxu0 0.0
    %138 = vmatpush2.xpose.msra.mxu0 0.0
    %139 = vmatprep.mubr.f32.mxu0 0.0
    %140 = vmatmul.mubr.f32.gmra.mxu0 %v57
    %v141 = vpop.f32.mrf.mxu0
    %v142 = vadd.f32 0.0, %v141
    %v143 = vpop.f32.mrf.mxu0
    %144 = vdwg.mxu0
    %v145 = vadd.f32 %v58, %v142
    %146 = vst [vmem:[#allocation2] sm:$0xff] %v145
    // Predicated region
    $region30: #{tpu_custom_call.1} parent=1 // pred_check
      %p147 = pneg %p44
    $region31: #{tpu_custom_call.1} parent=1 // pred_check_branch
      %149 = sbr.rel (%p147) target = $region33
    $region32: #{tpu_custom_call.1} parent=1 // pred_region
      %v150 = vld [vmem:[#allocation2] sm:$0xff]
      %v151 = vld [vmem:[%s3] sm:$0x1]
      %v153 = vlaneseq
      %v154 = vshrl.u32 %v153, 7
      %v155 = vsub.s32 0, %v154
      %v156 = vrot.slane %v151, %v155
      %v158 = vadd.f32 %v150, %v156
      %159 = vst [vmem:[#allocation8] sm:$0xff] %v158
    $region33: #{tpu_custom_call.1} parent=1 // pred_fallthru
      _
    // Predicated region
    $region34: #{tpu_custom_call.1} parent=1 // pred_check
      _
    $region35: #{tpu_custom_call.1} parent=1 // pred_check_branch
      %161 = sbr.rel (0) target = $region37
    $region36: #{tpu_custom_call.1} parent=1 // pred_region
      %s163 = ssub.s32 128, 128
      %164 = vsyncadd [#allocation5], %s163
      %s166 = sshll.u32 [#allocation8], 4
      %s167 = int_to_ptr.vmem [resolvable:$true] %s166
      %169 = dma.vmem_to_hbm [thread:$0]  %s167, 128, %s4, [#allocation5]
    $region37: #{tpu_custom_call.1} parent=1 // pred_fallthru
      _
    // Predicated region
    $region38: #{tpu_custom_call.1} parent=1 // pred_check
      _
    $region39: #{tpu_custom_call.1} parent=1 // pred_check_branch
      %171 = sbr.rel (0) target = $region41
    $region40: #{tpu_custom_call.1} parent=1 // pred_region
      %172 = dma.done [#allocation5], 128
    $region41: #{tpu_custom_call.1} parent=1 // pred_fallthru
      _
    %173 = vsyncpa [#allocation4], 1
    %174 = vsyncpa [#allocation7], 1
    %175 = vsyncpa [#allocation5], 1

</llo_original>
